<compile_context>
chip_gen: v7x
topology: tpu7x:2x2x1
jax: 0.10.0
libtpu: 0.0.40
codegen_flags: <defaults>
</compile_context>

<pallas_src>
import functools

import jax
import jax.numpy as jnp
from jax.experimental import pallas as pl
from jax.experimental.pallas import tpu as pltpu


@functools.lru_cache(maxsize=None)
def _vmem_limit():
    """Per-generation VMEM budget: ~half of a v7x core, generous on v5e/v6e."""
    try:
        cap = pltpu.get_tpu_info().vmem_capacity_bytes
    except Exception:
        return 32 * 1024 * 1024
    if cap <= 64 * 1024 * 1024:          # v7x: 64 MiB/TC -> leave half for internals
        return cap // 2
    return min(cap - 32 * 1024 * 1024, 96 * 1024 * 1024)   # v5e/v6e: 128 MiB


def _pick_tile(dim, target, align):
    """Largest tile <= target that divides dim and respects alignment; full dim if small."""
    if dim <= target:
        return dim
    t = (target // align) * align
    while t >= align:
        if dim % t == 0:
            return t
        t -= align
    return dim  # fall back to a full (always legal) block


# ----------------------------------------------------------------------------
# Kernel 1: tiled projection   out = x @ W + b    (bf16 MXU inputs, f32 accum)
# ----------------------------------------------------------------------------
def _proj_kernel(x_ref, w_ref, b_ref, o_ref, acc_ref):
    kk = pl.program_id(2)

    @pl.when(kk == 0)
    def _():
        acc_ref[...] = jnp.zeros_like(acc_ref)

    acc_ref[...] += jnp.dot(x_ref[...].astype(jnp.bfloat16),
                            w_ref[...].astype(jnp.bfloat16),
                            preferred_element_type=jnp.float32)

    @pl.when(kk == pl.num_programs(2) - 1)
    def _():
        o_ref[...] = (acc_ref[...] + b_ref[...]).astype(o_ref.dtype)


def projection(x, w, b, *, out_dtype=None, tm=512, tn=512, tk=512):
    """x: (M, K), w: (K, N) [bf16], b: (N,) [f32] -> (M, N) in out_dtype."""
    M, K = x.shape
    _, N = w.shape
    out_dtype = out_dtype or x.dtype
    tm = _pick_tile(M, tm, 16)    # 16-row sublane alignment: safe for bf16 and f32
    tn = _pick_tile(N, tn, 128)
    tk = _pick_tile(K, tk, 128)
    grid = (M // tm, N // tn, K // tk)

    flops = 2 * M * N * K
    bytes_accessed = (x.dtype.itemsize * M * K * (N // tn)
                      + w.dtype.itemsize * K * N
                      + jnp.dtype(out_dtype).itemsize * M * N + 4 * N)

    return pl.pallas_call(
        _proj_kernel,
        out_shape=jax.ShapeDtypeStruct((M, N), out_dtype),
        grid_spec=pltpu.PrefetchScalarGridSpec(
            num_scalar_prefetch=0,
            grid=grid,
            in_specs=[
                pl.BlockSpec((tm, tk), lambda i, j, k: (i, k)),
                pl.BlockSpec((tk, tn), lambda i, j, k: (k, j)),
                pl.BlockSpec((1, tn), lambda i, j, k: (0, j)),
            ],
            out_specs=pl.BlockSpec((tm, tn), lambda i, j, k: (i, j)),
            scratch_shapes=[pltpu.VMEM((tm, tn), jnp.float32)],
        ),
        compiler_params=pltpu.CompilerParams(
            dimension_semantics=("parallel", "parallel", "arbitrary"),
            vmem_limit_bytes=_vmem_limit(),
        ),
        cost_estimate=pl.CostEstimate(
            flops=flops, transcendentals=0, bytes_accessed=bytes_accessed),
    )(x, w, b.reshape(1, N).astype(jnp.float32))


# ----------------------------------------------------------------------------
# Kernel 2: flash-style attention, all heads per (batch, q-tile), KV grid axis
# ----------------------------------------------------------------------------
def _flash_attn_kernel(q_ref, k_ref, v_ref, o_ref, m_ref, l_ref, acc_ref,
                       *, num_heads, head_dim, scale, approx_recip):
    # q_ref: (tq, C) bf16, k_ref/v_ref: (tkv, C) bf16, o_ref: (tq, C)
    # m_ref/l_ref: (tq, H) f32 running max / denom, acc_ref: (tq, C) f32 running ctx
    kv = pl.program_id(2)

    @pl.when(kv == 0)
    def _():
        m_ref[...] = jnp.full_like(m_ref, -jnp.inf)
        l_ref[...] = jnp.zeros_like(l_ref)
        acc_ref[...] = jnp.zeros_like(acc_ref)

    for h in range(num_heads):  # static unroll; every head drains to VMEM scratch
        lo = h * head_dim
        hi = lo + head_dim
        q = q_ref[:, lo:hi] * scale        # (tq, D)  bf16, scale folded into q
        k = k_ref[:, lo:hi]                # (tkv, D) bf16
        v = v_ref[:, lo:hi]                # (tkv, D) bf16

        # TODO(synk): contraction over k's lane dim implies an XLU transpose per block;
        #             amortize by caching K^T per batch in a VMEM scratch if S is large.
        s = jax.lax.dot_general(q, k, (((1,), (1,)), ((), ())),
                                preferred_element_type=jnp.float32)   # (tq, tkv) f32

        m_prev = m_ref[:, h:h + 1]
        m_new = jnp.maximum(m_prev, jnp.max(s, axis=-1, keepdims=True))
        alpha = jnp.exp(m_prev - m_new)
        p = jnp.exp(s - m_new)
        l_ref[:, h:h + 1] = alpha * l_ref[:, h:h + 1] + jnp.sum(p, axis=-1, keepdims=True)
        pv = jnp.dot(p.astype(v.dtype), v, preferred_element_type=jnp.float32)
        acc_ref[:, lo:hi] = alpha * acc_ref[:, lo:hi] + pv
        m_ref[:, h:h + 1] = m_new

    @pl.when(kv == pl.num_programs(2) - 1)
    def _():
        for h in range(num_heads):
            lo = h * head_dim
            hi = lo + head_dim
            denom = l_ref[:, h:h + 1]
            if approx_recip:
                acc_ref[:, lo:hi] *= pl.reciprocal(denom, approx=True)  # EUP slot
            else:
                acc_ref[:, lo:hi] /= denom
        o_ref[...] = acc_ref[...].astype(o_ref.dtype)   # single lane-dense store


def attention_core(q_arr, k_arr, v_arr, qc, kc, vc, *, num_heads, head_dim,
                   out_dtype=jnp.bfloat16, tq=256, tkv=256, approx_recip=True):
    """q_arr: (B, T, Cq), k_arr/v_arr: (B, S, Ck). qc/kc/vc are column *block* indices
    (in units of C = num_heads*head_dim) selecting q/k/v inside a fused last dim."""
    B, T = q_arr.shape[0], q_arr.shape[1]
    S = k_arr.shape[1]
    C = num_heads * head_dim
    scale = 1.0 / (head_dim ** 0.5)
    tq = _pick_tile(T, tq, 16)
    tkv = _pick_tile(S, tkv, 16)
    grid = (B, T // tq, S // tkv)

    kernel = functools.partial(
        _flash_attn_kernel, num_heads=num_heads, head_dim=head_dim,
        scale=scale, approx_recip=approx_recip)

    q_spec = pl.BlockSpec((None, tq, C), lambda b, t, kv, c=qc: (b, t, c))
    k_spec = pl.BlockSpec((None, tkv, C), lambda b, t, kv, c=kc: (b, kv, c))
    v_spec = pl.BlockSpec((None, tkv, C), lambda b, t, kv, c=vc: (b, kv, c))
    o_spec = pl.BlockSpec((None, tq, C), lambda b, t, kv: (b, t, 0))

    flops = 4 * B * T * S * C
    transcendentals = 2 * B * num_heads * T * S
    bytes_accessed = 2 * B * (T * C + 2 * S * C * max(1, T // tq) + T * C)

    return pl.pallas_call(
        kernel,
        out_shape=jax.ShapeDtypeStruct((B, T, C), out_dtype),
        grid_spec=pltpu.PrefetchScalarGridSpec(
            num_scalar_prefetch=0,
            grid=grid,
            in_specs=[q_spec, k_spec, v_spec],
            out_specs=o_spec,
            scratch_shapes=[
                pltpu.VMEM((tq, num_heads), jnp.float32),   # running max m
                pltpu.VMEM((tq, num_heads), jnp.float32),   # running denom l
                pltpu.VMEM((tq, C), jnp.float32),           # running context
            ],
        ),
        compiler_params=pltpu.CompilerParams(
            dimension_semantics=("parallel", "parallel", "arbitrary"),
            vmem_limit_bytes=_vmem_limit(),
        ),
        cost_estimate=pl.CostEstimate(
            flops=flops, transcendentals=transcendentals,
            bytes_accessed=bytes_accessed),
    )(q_arr, k_arr, v_arr)


# ----------------------------------------------------------------------------
# Parameter preparation (one-time; hoisted out of forward)
# ----------------------------------------------------------------------------
def prepare_params(raw):
    """bf16 weights + QKV fused along N.  Call once, reuse across forward calls."""
    p = {}
    for name in ("q", "k", "v", "o"):
        p["w" + name] = raw["w" + name].astype(jnp.bfloat16)
        p["b" + name] = raw["b" + name].astype(jnp.float32)
    p["w_qkv"] = jnp.concatenate([p["wq"], p["wk"], p["wv"]], axis=1)        # (C, 3C)
    p["b_qkv"] = jnp.concatenate(
        [raw["bq"], raw["bk"], raw["bv"]]).astype(jnp.float32)               # (3C,)
    return p


# ----------------------------------------------------------------------------
# Full module forward
# ----------------------------------------------------------------------------
def multi_head_attention(params, query, key, value, mask=None, *, num_heads,
                         approx_recip=True):
    """Fused-QKV path requires self-attention (selected via Python object identity:
    query is key is value) and C % 128 == 0; otherwise falls back to 3 projections."""
    # TODO(synk): mask argument not implemented (mask=None path only).
    assert mask is None, "mask not implemented"
    B, T, C = query.shape
    S = key.shape[1]
    head_dim = C // num_heads

    fused = (query is key) and (query is value) and (C % 128 == 0)
    if fused:
        qkv = projection(query.reshape(B * T, C), params["w_qkv"], params["b_qkv"],
                         out_dtype=jnp.bfloat16)                      # (B*T, 3C)
        qkv = qkv.reshape(B, T, 3 * C)
        q_arr = k_arr = v_arr = qkv
        qc, kc, vc = 0, 1, 2          # column block indices into the fused last dim
    else:
        q_arr = projection(query.reshape(B * T, C), params["wq"], params["bq"],
                           out_dtype=jnp.bfloat16).reshape(B, T, C)
        k_arr = projection(key.reshape(B * S, C), params["wk"], params["bk"],
                           out_dtype=jnp.bfloat16).reshape(B, S, C)
        v_arr = projection(value.reshape(B * S, C), params["wv"], params["bv"],
                           out_dtype=jnp.bfloat16).reshape(B, S, C)
        qc = kc = vc = 0

    ctx = attention_core(q_arr, k_arr, v_arr, qc, kc, vc,
                         num_heads=num_heads, head_dim=head_dim,
                         approx_recip=approx_recip)                   # (B, T, C) bf16

    out = projection(ctx.reshape(B * T, C), params["wo"], params["bo"],
                     out_dtype=query.dtype)                           # (B*T, C)
    return out.reshape(B, T, C)


# ----------------------------------------------------------------------------
# Pure-JAX f32 reference for correctness checking
# ----------------------------------------------------------------------------
def reference(raw, query, key, value, *, num_heads):
    B, T, C = query.shape
    S = key.shape[1]
    head_dim = C // num_heads
    q = query @ raw["wq"] + raw["bq"]
    k = key @ raw["wk"] + raw["bk"]
    v = value @ raw["wv"] + raw["bv"]
    q = q.reshape(B, T, num_heads, head_dim).transpose(0, 2, 1, 3)
    k = k.reshape(B, S, num_heads, head_dim).transpose(0, 2, 1, 3)
    v = v.reshape(B, S, num_heads, head_dim).transpose(0, 2, 1, 3)
    scores = jnp.einsum("bhtd,bhsd->bhts", q, k) / (head_dim ** 0.5)
    attn = jax.nn.softmax(scores, axis=-1)
    ctx = jnp.einsum("bhts,bhsd->bhtd", attn, v)
    ctx = ctx.transpose(0, 2, 1, 3).reshape(B, T, C)
    return ctx @ raw["wo"] + raw["bo"]


if __name__ == "__main__":
    B, T, S, C, H = 2, 8, 16, 128, 4   # batch, q-seq, kv-seq, embed_dim, num_heads
    key0 = jax.random.PRNGKey(0)
    keys = jax.random.split(key0, 12)

    scale = 1.0 / (C ** 0.5)
    raw = {
        "wq": jax.random.uniform(keys[0], (C, C), jnp.float32, -scale, scale),
        "bq": jax.random.uniform(keys[1], (C,), jnp.float32, -scale, scale),
        "wk": jax.random.uniform(keys[2], (C, C), jnp.float32, -scale, scale),
        "bk": jax.random.uniform(keys[3], (C,), jnp.float32, -scale, scale),
        "wv": jax.random.uniform(keys[4], (C, C), jnp.float32, -scale, scale),
        "bv": jax.random.uniform(keys[5], (C,), jnp.float32, -scale, scale),
        "wo": jax.random.uniform(keys[6], (C, C), jnp.float32, -scale, scale),
        "bo": jax.random.uniform(keys[7], (C,), jnp.float32, -scale, scale),
    }
    params = prepare_params(raw)   # one-time prep: bf16 weights + fused (C, 3C) QKV

    # bf16 MXU inputs vs f32 reference -> slightly looser tolerance.
    ATOL = RTOL = 3e-2

    # --- self-attention (fused QKV projection + flash attention) ---
    x = jax.random.normal(keys[8], (B, T, C), jnp.float32)
    out_self = multi_head_attention(params, x, x, x, num_heads=H)
    out_self = jax.block_until_ready(out_self)
    ref_self = reference(raw, x, x, x, num_heads=H)
    assert out_self.shape == (B, T, C)
    assert jnp.allclose(out_self, ref_self, atol=ATOL, rtol=RTOL), "self-attn mismatch"

    # --- cross-attention, T != S (separate-projection path) ---
    query = jax.random.normal(keys[9], (B, T, C), jnp.float32)
    key_in = jax.random.normal(keys[10], (B, S, C), jnp.float32)
    value = jax.random.normal(keys[11], (B, S, C), jnp.float32)
    out_cross = multi_head_attention(params, query, key_in, value, num_heads=H)
    out_cross = jax.block_until_ready(out_cross)
    ref_cross = reference(raw, query, key_in, value, num_heads=H)
    assert out_cross.shape == (B, T, C)
    assert jnp.allclose(out_cross, ref_cross, atol=ATOL, rtol=RTOL), "cross-attn mismatch"

    print("KERNEL_OK")
</pallas_src>

<mosaic_0001>
module attributes {stable_mosaic.version = 11 : i64} {
  func.func @_proj_kernel(%arg0: i32, %arg1: i32, %arg2: i32, %arg3: memref<16x128xf32, #tpu.memory_space<vmem>>, %arg4: memref<128x384xbf16, #tpu.memory_space<vmem>>, %arg5: memref<1x384xf32, #tpu.memory_space<vmem>>, %arg6: memref<16x384xbf16, #tpu.memory_space<vmem>>, %arg7: memref<16x384xf32, #tpu.memory_space<vmem>>) attributes {dimension_semantics = [#tpu.dimension_semantics<parallel>, #tpu.dimension_semantics<parallel>, #tpu.dimension_semantics<arbitrary>], iteration_bounds = array<i64: 1, 1, 1>, scalar_prefetch = 0 : i64, scratch_operands = 1 : i64, tpu.core_type = #tpu.core_type<tc>, window_params = [{transform_indices = @transform_0, window_bounds = array<i64: 16, 128>}, {transform_indices = @transform_1, window_bounds = array<i64: 128, 384>}, {transform_indices = @transform_2, window_bounds = array<i64: 1, 384>}, {transform_indices = @transform_3, window_bounds = array<i64: 16, 384>}]} {
    %c0_i32 = arith.constant 0 : i32
    %0 = arith.cmpi eq, %arg2, %c0_i32 : i32
    %1 = arith.extui %0 : i1 to i32
    %c0_i32_0 = arith.constant 0 : i32
    %2 = arith.cmpi ne, %1, %c0_i32_0 : i32
    scf.if %2 {
      %cst_10 = arith.constant 0.000000e+00 : f32
      %13 = vector.broadcast %cst_10 : f32 to vector<16x384xf32>
      %c0_11 = arith.constant 0 : index
      %c0_12 = arith.constant 0 : index
      %14 = vector.load %arg7[%c0_11, %c0_12] : memref<16x384xf32, #tpu.memory_space<vmem>>, vector<16x384xf32>
      tpu.vector_store %arg7[%c0_11, %c0_12], %13 {strides = array<i32>} : memref<16x384xf32, #tpu.memory_space<vmem>>, vector<16x384xf32>,
    } else {
    }
    %c0 = arith.constant 0 : index
    %c0_1 = arith.constant 0 : index
    %3 = vector.load %arg7[%c0, %c0_1] : memref<16x384xf32, #tpu.memory_space<vmem>>, vector<16x384xf32>
    %c0_2 = arith.constant 0 : index
    %c0_3 = arith.constant 0 : index
    %4 = vector.load %arg3[%c0_2, %c0_3] : memref<16x128xf32, #tpu.memory_space<vmem>>, vector<16x128xf32>
    %5 = arith.truncf %4 : vector<16x128xf32> to vector<16x128xbf16>
    %c0_4 = arith.constant 0 : index
    %c0_5 = arith.constant 0 : index
    %6 = vector.load %arg4[%c0_4, %c0_5] : memref<128x384xbf16, #tpu.memory_space<vmem>>, vector<128x384xbf16>
    %cst = arith.constant dense<0.000000e+00> : vector<16x384xf32>
    %7 = tpu.matmul %5, %6, %cst {dimension_numbers = #tpu.dot_dimension_numbers<[1], [0], [0], [1], [0, 0, 1, 1], [], []>} : vector<16x128xbf16>, vector<128x384xbf16>, vector<16x384xf32> -> vector<16x384xf32>
    %8 = arith.addf %3, %7 : vector<16x384xf32>
    %c0_6 = arith.constant 0 : index
    %c0_7 = arith.constant 0 : index
    %9 = vector.load %arg7[%c0_6, %c0_7] : memref<16x384xf32, #tpu.memory_space<vmem>>, vector<16x384xf32>
    tpu.vector_store %arg7[%c0_6, %c0_7], %8 {strides = array<i32>} : memref<16x384xf32, #tpu.memory_space<vmem>>, vector<16x384xf32>,
    %c0_i32_8 = arith.constant 0 : i32
    %10 = arith.cmpi eq, %arg2, %c0_i32_8 : i32
    %11 = arith.extui %10 : i1 to i32
    %c0_i32_9 = arith.constant 0 : i32
    %12 = arith.cmpi ne, %11, %c0_i32_9 : i32
    scf.if %12 {
      %c0_10 = arith.constant 0 : index
      %c0_11 = arith.constant 0 : index
      %13 = vector.load %arg7[%c0_10, %c0_11] : memref<16x384xf32, #tpu.memory_space<vmem>>, vector<16x384xf32>
      %c0_12 = arith.constant 0 : index
      %c0_13 = arith.constant 0 : index
      %14 = vector.load %arg5[%c0_12, %c0_13] : memref<1x384xf32, #tpu.memory_space<vmem>>, vector<1x384xf32>
      %15 = vector.broadcast %14 : vector<1x384xf32> to vector<16x384xf32>
      %16 = arith.addf %13, %15 : vector<16x384xf32>
      %17 = arith.truncf %16 : vector<16x384xf32> to vector<16x384xbf16>
      %c0_14 = arith.constant 0 : index
      %c0_15 = arith.constant 0 : index
      %18 = vector.load %arg6[%c0_14, %c0_15] : memref<16x384xbf16, #tpu.memory_space<vmem>>, vector<16x384xbf16>
      tpu.vector_store %arg6[%c0_14, %c0_15], %17 {strides = array<i32>} : memref<16x384xbf16, #tpu.memory_space<vmem>>, vector<16x384xbf16>,
    } else {
    }
    return
  }
  func.func @transform_0(%arg0: i32, %arg1: i32, %arg2: i32) -> (i32, i32) {
    %c0_i32 = arith.constant 0 : i32
    return %arg0, %arg2 : i32, i32
  }
  func.func @transform_1(%arg0: i32, %arg1: i32, %arg2: i32) -> (i32, i32) {
    %c0_i32 = arith.constant 0 : i32
    return %arg2, %arg1 : i32, i32
  }
  func.func @transform_2(%arg0: i32, %arg1: i32, %arg2: i32) -> (i32, i32) {
    %c0_i32 = arith.constant 0 : i32
    %c0_i32_0 = arith.constant 0 : i32
    return %c0_i32, %arg1 : i32, i32
  }
  func.func @transform_3(%arg0: i32, %arg1: i32, %arg2: i32) -> (i32, i32) {
    %c0_i32 = arith.constant 0 : i32
    return %arg0, %arg1 : i32, i32
  }
}

</mosaic_0001>

<llo_original>
// kernel: tpu_custom_call.1
$region0: #{tpu_custom_call.1}
  #allocation0 [shape = 'u32[]', space=smem, size = 0x4, offset = 0x4, fixed_abs, tag = 'smem constant byte address 0x4 - core index']
  #allocation1 [shape = 'u32[144,128]{1,0:T(1,128)}', space=vmem, size = 0x12000, scoped, tag = 'internal scratch']
  #allocation2 [shape = 'f32[16,384]{1,0:T(8,128)}', space=vmem, size = 0x6000, scoped, tag = 'scratch operand']
  %s0 = inlined_call_operand.hbm [shape: f32[16,128], index: 0, kind: input, shape index: {}]
  %s1 = inlined_call_operand.hbm [shape: bf16[128,384], index: 1, kind: input, shape index: {}]
  %s2 = inlined_call_operand.vmem [shape: f32[1,384], index: 2, kind: input, shape index: {}]
  %s3 = inlined_call_operand.hbm [shape: bf16[16,384], index: 3, kind: output, shape index: {}]
  %s4 = sld [smem:[#allocation0]]
  $region38: #{tpu_custom_call.1} parent=0
    _
  %s6 = ssub.s32 1, %s4
  %s7 = scalar_select 0, %s6, %s4
  $region1: #{tpu_custom_call.1} parent=0
    #allocation3 [shape = 'u8[8192]{0}', space=vmem, size = 0x2000, scoped, tag = 'input window, operand 0, single buffered']
    #allocation4 [shape = 's32[1]{0}', space=sflag, size = 0x4, scoped, tag = 'scoped memory for tpu_custom_call.1']
    #allocation5 [shape = 's32[1]{0}', space=sflag, size = 0x4, scoped, tag = 'scoped memory for tpu_custom_call.1']
    #allocation6 [shape = 'u8[98304]{0}', space=vmem, size = 0x18000, scoped, tag = 'input window, operand 1, single buffered']
    #allocation7 [shape = 's32[1]{0}', space=sflag, size = 0x4, scoped, tag = 'scoped memory for tpu_custom_call.1']
    #allocation8 [shape = 'u8[12288]{0}', space=vmem, size = 0x3000, scoped, tag = 'output window, operand 0, single buffered']
    %8 = vsyncpa [#allocation4], 0
    %9 = vsyncpa [#allocation7], 0
    %10 = vsyncpa [#allocation5], 0
    // Predicated region
    $region2: #{tpu_custom_call.1} parent=1 // pred_check
      _
    $region3: #{tpu_custom_call.1} parent=1 // pred_check_branch
      %12 = sbr.rel (0) target = $region5
    $region4: #{tpu_custom_call.1} parent=1 // pred_region
      %s14 = ssub.s32 256, 256
      %15 = vsyncadd [#allocation4], %s14
      %s16 = sshll.u32 [#allocation3], 4
      %s17 = int_to_ptr.vmem [resolvable:$true] %s16
      %22 = dma.hbm_to_vmem [thread:$0]  %s0, 256, %s17, [#allocation4], 128, 128, 8
    $region5: #{tpu_custom_call.1} parent=1 // pred_fallthru
      _
    // Predicated region
    $region6: #{tpu_custom_call.1} parent=1 // pred_check
      _
    $region7: #{tpu_custom_call.1} parent=1 // pred_check_branch
      %24 = sbr.rel (0) target = $region9
    $region8: #{tpu_custom_call.1} parent=1 // pred_region
      %s26 = ssub.s32 3072, 3072
      %27 = vsyncadd [#allocation7], %s26
      %s28 = sshll.u32 [#allocation6], 4
      %s29 = int_to_ptr.vmem [resolvable:$true] %s28
      %34 = dma.hbm_to_vmem [thread:$0]  %s1, 3072, %s29, [#allocation7], 192, 192, 12
    $region9: #{tpu_custom_call.1} parent=1 // pred_fallthru
      _
    // Predicated region
    $region10: #{tpu_custom_call.1} parent=1 // pred_check
      _
    $region11: #{tpu_custom_call.1} parent=1 // pred_check_branch
      %36 = sbr.rel (0) target = $region13
    $region12: #{tpu_custom_call.1} parent=1 // pred_region
      _
    $region13: #{tpu_custom_call.1} parent=1 // pred_fallthru
      _
    // Predicated region
    $region14: #{tpu_custom_call.1} parent=1 // pred_check
      _
    $region15: #{tpu_custom_call.1} parent=1 // pred_check_branch
      %38 = sbr.rel (0) target = $region17
    $region16: #{tpu_custom_call.1} parent=1 // pred_region
      %39 = dma.done [#allocation4], 256
    $region17: #{tpu_custom_call.1} parent=1 // pred_fallthru
      _
    // Predicated region
    $region18: #{tpu_custom_call.1} parent=1 // pred_check
      _
    $region19: #{tpu_custom_call.1} parent=1 // pred_check_branch
      %41 = sbr.rel (0) target = $region21
    $region20: #{tpu_custom_call.1} parent=1 // pred_region
      %42 = dma.done [#allocation7], 3072
    $region21: #{tpu_custom_call.1} parent=1 // pred_fallthru
      _
    %p44 = scmp.eq.s32.totalorder 0, 0
    // Predicated region
    $region22: #{tpu_custom_call.1} parent=1 // pred_check
      %p45 = pneg %p44
    $region23: #{tpu_custom_call.1} parent=1 // pred_check_branch
      %47 = sbr.rel (%p45) target = $region25
    $region24: #{tpu_custom_call.1} parent=1 // pred_region
      %48 = vst [vmem:[#allocation2] sm:$0xff] 0.0
      %49 = vst [vmem:[#allocation2 + $0x8] sm:$0xff] 0.0
      %50 = vst [vmem:[#allocation2 + $0x10] sm:$0xff] 0.0
      %51 = vst [vmem:[#allocation2 + $0x18] sm:$0xff] 0.0
      %52 = vst [vmem:[#allocation2 + $0x20] sm:$0xff] 0.0
      %53 = vst [vmem:[#allocation2 + $0x28] sm:$0xff] 0.0
    $region25: #{tpu_custom_call.1} parent=1 // pred_fallthru
      _
    %v54 = vld [vmem:[#allocation2] sm:$0xff]
    %v55 = vld [vmem:[#allocation2 + $0x8] sm:$0xff]
    %v56 = vld [vmem:[#allocation2 + $0x10] sm:$0xff]
    %v57 = vld [vmem:[#allocation2 + $0x18] sm:$0xff]
    %v58 = vld [vmem:[#allocation2 + $0x20] sm:$0xff]
    %v59 = vld [vmem:[#allocation2 + $0x28] sm:$0xff]
    %v60 = vld [vmem:[#allocation3] sm:$0xff]
    %v61 = vld [vmem:[#allocation3 + $0x8] sm:$0xff]
    %v62 = vpack.c.bf16 %v61, %v60
    %v63 = vld [vmem:[#allocation6] sm:$0xff]
    %v64 = vld [vmem:[#allocation6 + $0x8] sm:$0xf]
    %v65 = vld [vmem:[#allocation6 + $0xc] sm:$0xff]
    %v66 = vld [vmem:[#allocation6 + $0x14] sm:$0xf]
    %v67 = vld [vmem:[#allocation6 + $0x18] sm:$0xff]
    %v68 = vld [vmem:[#allocation6 + $0x20] sm:$0xf]
    %v69 = vld [vmem:[#allocation6 + $0x24] sm:$0xff]
    %v70 = vld [vmem:[#allocation6 + $0x2c] sm:$0xf]
    %v71 = vld [vmem:[#allocation6 + $0x30] sm:$0xff]
    %v72 = vld [vmem:[#allocation6 + $0x38] sm:$0xf]
    %v73 = vld [vmem:[#allocation6 + $0x3c] sm:$0xff]
    %v74 = vld [vmem:[#allocation6 + $0x44] sm:$0xf]
    %v75 = vld [vmem:[#allocation6 + $0x48] sm:$0xff]
    %v76 = vld [vmem:[#allocation6 + $0x50] sm:$0xf]
    %v77 = vld [vmem:[#allocation6 + $0x54] sm:$0xff]
    %v78 = vld [vmem:[#allocation6 + $0x5c] sm:$0xf]
    %v79 = vld [vmem:[#allocation6 + $0x60] sm:$0xff]
    %v80 = vld [vmem:[#allocation6 + $0x68] sm:$0xf]
    %v81 = vld [vmem:[#allocation6 + $0x6c] sm:$0xff]
    %v82 = vld [vmem:[#allocation6 + $0x74] sm:$0xf]
    %v83 = vld [vmem:[#allocation6 + $0x78] sm:$0xff]
    %v84 = vld [vmem:[#allocation6 + $0x80] sm:$0xf]
    %v85 = vld [vmem:[#allocation6 + $0x84] sm:$0xff]
    %v86 = vld [vmem:[#allocation6 + $0x8c] sm:$0xf]
    %v87 = vld [vmem:[#allocation6 + $0x90] sm:$0xff]
    %v88 = vld [vmem:[#allocation6 + $0x98] sm:$0xf]
    %v89 = vld [vmem:[#allocation6 + $0x9c] sm:$0xff]
    %v90 = vld [vmem:[#allocation6 + $0xa4] sm:$0xf]
    %v91 = vld [vmem:[#allocation6 + $0xa8] sm:$0xff]
    %v92 = vld [vmem:[#allocation6 + $0xb0] sm:$0xf]
    %v93 = vld [vmem:[#allocation6 + $0xb4] sm:$0xff]
    %v94 = vld [vmem:[#allocation6 + $0xbc] sm:$0xf]
    %v127 = vunpack.c.l.b16 %v63
    %v128 = vunpack.c.h.b16 %v63
    %v129 = vunpack.c.l.b16 %v64
    %v130 = vunpack.c.l.b16 %v65
    %v131 = vunpack.c.h.b16 %v65
    %v132 = vunpack.c.l.b16 %v66
    %v133 = vunpack.c.l.b16 %v67
    %v134 = vunpack.c.h.b16 %v67
    %v135 = vunpack.c.l.b16 %v68
    %v136 = vunpack.c.l.b16 %v69
    %v137 = vunpack.c.h.b16 %v69
    %v138 = vunpack.c.l.b16 %v70
    %v139 = vunpack.c.l.b16 %v71
    %v140 = vunpack.c.h.b16 %v71
    %v141 = vunpack.c.l.b16 %v72
    %v142 = vunpack.c.l.b16 %v73
    %v143 = vunpack.c.h.b16 %v73
    %v144 = vunpack.c.l.b16 %v74
    %v145 = vunpack.c.l.b16 %v75
    %v146 = vunpack.c.h.b16 %v75
    %v147 = vunpack.c.l.b16 %v76
    %v148 = vunpack.c.l.b16 %v77
    %v149 = vunpack.c.h.b16 %v77
    %v150 = vunpack.c.l.b16 %v78
    %v151 = vunpack.c.l.b16 %v79
    %v152 = vunpack.c.h.b16 %v79
    %v153 = vunpack.c.l.b16 %v80
    %v154 = vunpack.c.l.b16 %v81
    %v155 = vunpack.c.h.b16 %v81
    %v156 = vunpack.c.l.b16 %v82
    %v157 = vunpack.c.l.b16 %v83
    %v158 = vunpack.c.h.b16 %v83
    %v159 = vunpack.c.l.b16 %v84
    %v160 = vunpack.c.l.b16 %v85
    %v161 = vunpack.c.h.b16 %v85
    %v162 = vunpack.c.l.b16 %v86
    %v163 = vunpack.c.l.b16 %v87
    %v164 = vunpack.c.h.b16 %v87
    %v165 = vunpack.c.l.b16 %v88
    %v166 = vunpack.c.l.b16 %v89
    %v167 = vunpack.c.h.b16 %v89
    %v168 = vunpack.c.l.b16 %v90
    %v169 = vunpack.c.l.b16 %v91
    %v170 = vunpack.c.h.b16 %v91
    %v171 = vunpack.c.l.b16 %v92
    %v172 = vunpack.c.l.b16 %v93
    %v173 = vunpack.c.h.b16 %v93
    %v174 = vunpack.c.l.b16 %v94
    %v175 = vpack.c.b16 %v130, %v127
    %v176 = vpack.c.b16 %v131, %v128
    %v177 = vpack.c.b16 %v132, %v129
    %v178 = vpack.c.b16 %v136, %v133
    %v179 = vpack.c.b16 %v137, %v134
    %v180 = vpack.c.b16 %v138, %v135
    %v181 = vpack.c.b16 %v142, %v139
    %v182 = vpack.c.b16 %v143, %v140
    %v183 = vpack.c.b16 %v144, %v141
    %v184 = vpack.c.b16 %v148, %v145
    %v185 = vpack.c.b16 %v149, %v146
    %v186 = vpack.c.b16 %v150, %v147
    %v187 = vpack.c.b16 %v154, %v151
    %v188 = vpack.c.b16 %v155, %v152
    %v189 = vpack.c.b16 %v156, %v153
    %v190 = vpack.c.b16 %v160, %v157
    %v191 = vpack.c.b16 %v161, %v158
    %v192 = vpack.c.b16 %v162, %v159
    %v193 = vpack.c.b16 %v166, %v163
    %v194 = vpack.c.b16 %v167, %v164
    %v195 = vpack.c.b16 %v168, %v165
    %v196 = vpack.c.b16 %v172, %v169
    %v197 = vpack.c.b16 %v173, %v170
    %v198 = vpack.c.b16 %v174, %v171
    %223 = vmatprep.subr.bf16.mxu0 %v176
    %224 = vmatpush1.bf16.msra.mxu0 %v175
    %225 = vmatprep.subr.bf16.mxu0 %v179
    %226 = vmatpush1.bf16.msra.mxu0 %v178
    %227 = vmatprep.subr.bf16.mxu0 %v182
    %228 = vmatpush1.bf16.msra.mxu0 %v181
    %229 = vmatprep.subr.bf16.mxu0 %v185
    %230 = vmatpush1.bf16.msra.mxu0 %v184
    %231 = vmatprep.subr.bf16.mxu0 %v188
    %232 = vmatpush1.bf16.msra.mxu0 %v187
    %233 = vmatprep.subr.bf16.mxu0 %v191
    %234 = vmatpush1.bf16.msra.mxu0 %v190
    %235 = vmatprep.subr.bf16.mxu0 %v194
    %236 = vmatpush1.bf16.msra.mxu0 %v193
    %237 = vmatprep.subr.bf16.mxu0 %v197
    %238 = vmatpush1.bf16.msra.mxu0 %v196
    %239 = vmatprep.subr.bf16.mxu0 0
    %240 = vmatpush1.bf16.msra.mxu0 0
    %241 = vmatprep.subr.bf16.mxu0 0
    %242 = vmatpush1.bf16.msra.mxu0 0
    %243 = vmatprep.subr.bf16.mxu0 0
    %244 = vmatpush1.bf16.msra.mxu0 0
    %245 = vmatprep.subr.bf16.mxu0 0
    %246 = vmatpush1.bf16.msra.mxu0 0
    %247 = vmatprep.subr.bf16.mxu0 0
    %248 = vmatpush1.bf16.msra.mxu0 0
    %249 = vmatprep.subr.bf16.mxu0 0
    %250 = vmatpush1.bf16.msra.mxu0 0
    %251 = vmatprep.subr.bf16.mxu0 0
    %252 = vmatpush1.bf16.msra.mxu0 0
    %253 = vmatprep.subr.bf16.mxu0 0
    %254 = vmatpush1.bf16.msra.mxu0 0
    %255 = vmatprep.mubr.bf16.mxu0 0
    %256 = vmatmul.mubr.bf16.gmra.mrb[0].mxu0 %v62
    %v257 = vpop.f32.mrb[0].mxu0
    %v258 = vadd.f32 0.0, %v257
    %v259 = vpop.f32.mrb[0].mxu0
    %v260 = vadd.f32 0.0, %v259
    %v261 = vpop.f32.mrb[0].mxu0
    %v262 = vadd.f32 0.0, %v261
    %v263 = vpop.f32.mrb[0].mxu0
    %v264 = vadd.f32 0.0, %v263
    %265 = vdwg.mxu0
    %266 = vmatprep.subr.bf16.mxu0 0
    %267 = vmatpush1.bf16.msra.mxu0 %v177
    %268 = vmatprep.subr.bf16.mxu0 0
    %269 = vmatpush1.bf16.msra.mxu0 %v180
    %270 = vmatprep.subr.bf16.mxu0 0
    %271 = vmatpush1.bf16.msra.mxu0 %v183
    %272 = vmatprep.subr.bf16.mxu0 0
    %273 = vmatpush1.bf16.msra.mxu0 %v186
    %274 = vmatprep.subr.bf16.mxu0 0
    %275 = vmatpush1.bf16.msra.mxu0 %v189
    %276 = vmatprep.subr.bf16.mxu0 0
    %277 = vmatpush1.bf16.msra.mxu0 %v192
    %278 = vmatprep.subr.bf16.mxu0 0
    %279 = vmatpush1.bf16.msra.mxu0 %v195
    %280 = vmatprep.subr.bf16.mxu0 0
    %281 = vmatpush1.bf16.msra.mxu0 %v198
    %282 = vmatprep.subr.bf16.mxu0 0
    %283 = vmatpush1.bf16.msra.mxu0 0
    %284 = vmatprep.subr.bf16.mxu0 0
    %285 = vmatpush1.bf16.msra.mxu0 0
    %286 = vmatprep.subr.bf16.mxu0 0
    %287 = vmatpush1.bf16.msra.mxu0 0
    %288 = vmatprep.subr.bf16.mxu0 0
    %289 = vmatpush1.bf16.msra.mxu0 0
    %290 = vmatprep.subr.bf16.mxu0 0
    %291 = vmatpush1.bf16.msra.mxu0 0
    %292 = vmatprep.subr.bf16.mxu0 0
    %293 = vmatpush1.bf16.msra.mxu0 0
    %294 = vmatprep.subr.bf16.mxu0 0
    %295 = vmatpush1.bf16.msra.mxu0 0
    %296 = vmatprep.subr.bf16.mxu0 0
    %297 = vmatpush1.bf16.msra.mxu0 0
    %298 = vmatprep.mubr.bf16.mxu0 0
    %299 = vmatmul.mubr.bf16.gmra.mrb[0].mxu0 %v62
    %v300 = vpop.f32.mrb[0].mxu0
    %v301 = vadd.f32 0.0, %v300
    %v302 = vpop.f32.mrb[0].mxu0
    %v303 = vpop.f32.mrb[0].mxu0
    %v304 = vadd.f32 0.0, %v303
    %v305 = vpop.f32.mrb[0].mxu0
    %306 = vdwg.mxu0
    %v307 = vadd.f32 %v54, %v258
    %v308 = vadd.f32 %v55, %v260
    %v309 = vadd.f32 %v56, %v301
    %v310 = vadd.f32 %v57, %v262
    %v311 = vadd.f32 %v58, %v264
    %v312 = vadd.f32 %v59, %v304
    %313 = vst [vmem:[#allocation2] sm:$0xff] %v307
    %314 = vst [vmem:[#allocation2 + $0x8] sm:$0xff] %v308
    %315 = vst [vmem:[#allocation2 + $0x10] sm:$0xff] %v309
    %316 = vst [vmem:[#allocation2 + $0x18] sm:$0xff] %v310
    %317 = vst [vmem:[#allocation2 + $0x20] sm:$0xff] %v311
    %318 = vst [vmem:[#allocation2 + $0x28] sm:$0xff] %v312
    // Predicated region
    $region26: #{tpu_custom_call.1} parent=1 // pred_check
      %p319 = pneg %p44
    $region27: #{tpu_custom_call.1} parent=1 // pred_check_branch
      %321 = sbr.rel (%p319) target = $region29
    $region28: #{tpu_custom_call.1} parent=1 // pred_region
      %v322 = vld [vmem:[#allocation2] sm:$0xff]
      %v323 = vld [vmem:[#allocation2 + $0x8] sm:$0xff]
      %v324 = vld [vmem:[#allocation2 + $0x10] sm:$0xff]
      %v325 = vld [vmem:[#allocation2 + $0x18] sm:$0xff]
      %v326 = vld [vmem:[#allocation2 + $0x20] sm:$0xff]
      %v327 = vld [vmem:[#allocation2 + $0x28] sm:$0xff]
      %v328 = vld [vmem:[%s2] sm:$0x7]
      %v330 = vlaneseq
      %v331 = vshrl.u32 %v330, 7
      %v332 = vsub.s32 0, %v331
      %v333 = vrot.slane %v328, %v332
      %v334 = vlaneseq
      %v335 = vshrl.u32 %v334, 7
      %v336 = vsub.s32 1, %v335
      %v337 = vrot.slane %v328, %v336
      %v338 = vlaneseq
      %v339 = vshrl.u32 %v338, 7
      %v340 = vsub.s32 2, %v339
      %v341 = vrot.slane %v328, %v340
      %v345 = vadd.f32 %v322, %v333
      %v346 = vadd.f32 %v323, %v337
      %v347 = vadd.f32 %v324, %v341
      %v348 = vadd.f32 %v325, %v333
      %v349 = vadd.f32 %v326, %v337
      %v350 = vadd.f32 %v327, %v341
      %v351 = vpack.c.bf16 %v348, %v345
      %v352 = vpack.c.bf16 %v349, %v346
      %v353 = vpack.c.bf16 %v350, %v347
      %v357 = vunpack.c.l.b16 %v351
      %v358 = vunpack.c.l.b16 %v352
      %v359 = vunpack.c.l.b16 %v353
      %v360 = vunpack.c.h.b16 %v351
      %v361 = vunpack.c.h.b16 %v352
      %v362 = vunpack.c.h.b16 %v353
      %v363 = vpack.c.b16 %v358, %v357
      %v364 = vpack.c.b16 %v359, %v359
      %v365 = vpack.c.b16 %v361, %v360
      %v366 = vpack.c.b16 %v362, %v362
      %371 = vst [vmem:[#allocation8] sm:$0xff] %v363
      %372 = vst [vmem:[#allocation8 + $0x8] sm:$0xf] %v364
      %373 = vst [vmem:[#allocation8 + $0xc] sm:$0xff] %v365
      %374 = vst [vmem:[#allocation8 + $0x14] sm:$0xf] %v366
    $region29: #{tpu_custom_call.1} parent=1 // pred_fallthru
      _
    // Predicated region
    $region30: #{tpu_custom_call.1} parent=1 // pred_check
      _
    $region31: #{tpu_custom_call.1} parent=1 // pred_check_branch
      %376 = sbr.rel (0) target = $region33
    $region32: #{tpu_custom_call.1} parent=1 // pred_region
      %s378 = ssub.s32 384, 384
      %379 = vsyncadd [#allocation5], %s378
      %s380 = sshll.u32 [#allocation8], 4
      %s381 = int_to_ptr.vmem [resolvable:$true] %s380
      %386 = dma.vmem_to_hbm [thread:$0]  %s381, 384, %s3, [#allocation5], 192, 192, 12
    $region33: #{tpu_custom_call.1} parent=1 // pred_fallthru
      _
    // Predicated region
    $region34: #{tpu_custom_call.1} parent=1 // pred_check
      _
    $region35: #{tpu_custom_call.1} parent=1 // pred_check_branch
      %388 = sbr.rel (0) target = $region37
    $region36: #{tpu_custom_call.1} parent=1 // pred_region
      %389 = dma.done [#allocation5], 384
    $region37: #{tpu_custom_call.1} parent=1 // pred_fallthru
      _
    %390 = vsyncpa [#allocation4], 1
    %391 = vsyncpa [#allocation7], 1
    %392 = vsyncpa [#allocation5], 1

</llo_original>
